<compile_context>
chip_gen: v6e
topology: v6e:2x2x1
jax: 0.10.0
libtpu: 0.0.40
codegen_flags: <defaults>
</compile_context>

<pallas_src>
import jax
import jax.numpy as jnp
from jax.experimental import pallas as pl
from jax.experimental.pallas import tpu as pltpu


def _hbm_copy_kernel(x_hbm, o_hbm, sem):
    # Single whole-array HBM->HBM DMA: no VMEM staging, no vector load/store.
    cp = pltpu.make_async_copy(x_hbm, o_hbm, sem)
    cp.start()
    cp.wait()


def test_forward(x, anchors=None, nA=2):
    """Pallas equivalent of Test.forward: x.view(nB, nA, -1, nH*nW).

    `anchors` is accepted for API parity with the PyTorch module but (as in
    the module's forward) is unused.
    """
    nB, C, nH, nW = x.shape
    assert C % nA == 0, "channel dim must be divisible by nA"
    nCpa = C // nA                      # the '-1' dim of the view
    total = nB * C * nH * nW            # total contiguous element count

    # Metadata-only reshape in the wrapper: present a lane/sublane-dense 2D
    # slab to the kernel.  The DMA is a contiguous whole-array copy, so the
    # exact 2D factorization is only for clean layout handling.
    if total % 128 == 0:
        slab_shape = (total // 128, 128)
    else:
        slab_shape = (1, total)
    x_slab = jnp.reshape(x, slab_shape)

    out_slab = pl.pallas_call(
        _hbm_copy_kernel,
        out_shape=jax.ShapeDtypeStruct(slab_shape, x.dtype),
        in_specs=[pl.BlockSpec(memory_space=pl.ANY)],
        out_specs=pl.BlockSpec(memory_space=pl.ANY),
        scratch_shapes=[pltpu.SemaphoreType.DMA(())],
    )(x_slab)

    # Final metadata-only reshape to the PyTorch .view() result shape.
    return jnp.reshape(out_slab, (nB, nA, nCpa, nH * nW))


if __name__ == "__main__":
    # Shapes consistent with the module: C divisible by nA=2, nC = C//nA - 5.
    nB, nA, nH, nW = 2, 2, 8, 8
    nC = 2
    C = nA * (nC + 5)  # = 14

    key = jax.random.PRNGKey(0)
    x = jax.random.normal(key, (nB, C, nH, nW), dtype=jnp.float32)

    # anchors parameter of Test.__init__ (unused in forward); kept for parity.
    anchors = jnp.asarray([1.0, 2.0, 3.0, 4.0], dtype=jnp.float32)

    out = test_forward(x, anchors=anchors, nA=nA)
    out = jax.block_until_ready(out)

    # Reference: PyTorch .view on a contiguous NCHW tensor == jnp.reshape.
    ref = jnp.reshape(x, (nB, nA, C // nA, nH * nW))
    assert out.shape == (nB, nA, C // nA, nH * nW)
    assert out.dtype == x.dtype
    assert jnp.array_equal(out, ref)

    print("KERNEL_OK")
</pallas_src>

<mosaic_0001>
module attributes {stable_mosaic.version = 11 : i64} {
  func.func @_hbm_copy_kernel(%arg0: memref<14x128xf32, #tpu.memory_space<any>>, %arg1: memref<14x128xf32, #tpu.memory_space<any>>, %arg2: memref<!tpu.dma_semaphore, #tpu.memory_space<semaphore_mem>>) attributes {dimension_semantics = [], scalar_prefetch = 0 : i64, scratch_operands = 1 : i64, tpu.core_type = #tpu.core_type<tc>} {
    tpu.enqueue_dma source(%arg0 : memref<14x128xf32, #tpu.memory_space<any>>) target(%arg1 : memref<14x128xf32, #tpu.memory_space<any>>) target_semaphore(%arg2 : memref<!tpu.dma_semaphore, #tpu.memory_space<semaphore_mem>>)
    tpu.wait_dma2 semaphore(%arg2 : memref<!tpu.dma_semaphore, #tpu.memory_space<semaphore_mem>>) src(%arg0 : memref<14x128xf32, #tpu.memory_space<any>>) dst(%arg1 : memref<14x128xf32, #tpu.memory_space<any>>)
    return
  }
}

</mosaic_0001>

<llo_original>
// kernel: tpu_custom_call.1
$region0: #{tpu_custom_call.1}
  #allocation0 [shape = 'u32[]', space=smem, size = 0x4, offset = 0x4, fixed_abs, tag = 'smem constant byte address 0x4 - core index']
  #allocation1 [shape = 'u32[144,128]{1,0:T(1,128)}', space=vmem, size = 0x12000, scoped, tag = 'internal scratch']
  #allocation2 [shape = 's32[1]{0}', space=sflag, size = 0x4, scoped, tag = 'scratch operand']
  #allocation3 [shape = 's32[]', space=sflag, size = 0x4, offset = 0, fixed_abs, tag = 'sflag constant byte address 0x0 - dummy sync flag']
  #allocation4 [shape = 'u32[0]{0}', space=smem, size = 0, offset = 0, fixed_abs, tag = 'smem constant byte address 0x0 - null']
  %s0 = inlined_call_operand.hbm [shape: f32[14,128], index: 0, kind: input, shape index: {}]
  %s1 = inlined_call_operand.hbm [shape: f32[14,128], index: 1, kind: output, shape index: {}]
  %s2 = sld [smem:[#allocation0]]
  $region2: #{tpu_custom_call.1} parent=0
    _
  %s4 = ssub.s32 1, %s2
  %s5 = scalar_select 0, %s4, %s2
  %s7 = sshll.u32 1, 14
  %s8 = sxor.u32 4294967295, %s7
  %12 = dma.general %s0, 224, %s1, [#allocation2], 131072, [#allocation4], 0, 0
  %s13 = smul.u32 14, 1
  %s14 = sshll.u32 %s13, 4
  %15 = dma.done [#allocation2], %s14
  %16 = vsyncmov [#allocation2]
  %s17 = vpop.sfrf %16
  %p18 = scmp.eq.s32.totalorder %s17, 0
  %p19 = pneg %p18
  %21 = shalt.err (%p19)

</llo_original>
